<compile_context>
chip_gen: v7x
topology: tpu7x:2x2x1
jax: 0.10.0
libtpu: 0.0.40
codegen_flags: <defaults>
</compile_context>

<pallas_src>
import jax
import jax.numpy as jnp
from jax import lax
from jax.experimental import pallas as pl
from jax.experimental.pallas import tpu as pltpu

# small, module-consistent shapes
N = 8            # number of graph embeddings per view (batch)
N_H = 16         # n_h : input embedding dim
HIDDEN = 32      # hidden_dim
NUM_HEADS = 4    # structurally irrelevant: softmax over a single key == 1
M_EMA = 0.999    # m
TEMP = 0.07      # T
BN_EPS = 1e-5    # BatchNorm1d eps
NORM_EPS = 1e-12  # F.normalize eps


# ---------------------------------------------------------------------------
# Fused forward kernel
# ---------------------------------------------------------------------------
def _contrastive_head_kernel(z_ref, za_ref,
                             w1s_ref, w2s_ref, vs_ref,
                             w1m_ref, w2m_ref, vm_ref,
                             wv_ref, wo_ref, vmha_ref,
                             o_ref):
    # Stack the two views on the sublane axis: rows 0:N = z, rows N:2N = z_a.
    zz = jnp.concatenate([z_ref[...], za_ref[...]], axis=0)            # (2N, n_h)

    # _momentum_update(): EMA of teacher params from student params.
    # (Value no-op here since the teacher is an exact copy, as in _init_momentum,
    #  but kept so arbitrary parameter values stay correct.)
    w1_k = M_EMA * w1m_ref[...] + (1.0 - M_EMA) * w1s_ref[...]         # (n_h, H)
    w2_k = M_EMA * w2m_ref[...] + (1.0 - M_EMA) * w2s_ref[...]         # (H, H)
    vk = M_EMA * vm_ref[...] + (1.0 - M_EMA) * vs_ref[...]             # (4, H): b1,gamma,beta,b2

    # momentum_proj: Linear -> BatchNorm1d (training-mode batch stats) -> ReLU -> Linear
    h = jnp.dot(zz, w1_k, preferred_element_type=jnp.float32) + vk[0:1, :]

    def bn(hb):  # per-branch batch stats (biased variance), exactly as two proj() calls
        mu = jnp.mean(hb, axis=0, keepdims=True)
        var = jnp.mean((hb - mu) ** 2, axis=0, keepdims=True)
        return (hb - mu) * lax.rsqrt(var + BN_EPS)

    hn = jnp.concatenate([bn(h[:N, :]), bn(h[N:, :])], axis=0)          # (2N, H)
    hn = hn * vk[1:2, :] + vk[2:3, :]
    hr = jnp.maximum(hn, 0.0)                                           # ReLU
    k_all = jnp.dot(hr, w2_k, preferred_element_type=jnp.float32) + vk[3:4, :]
    # k_all rows 0:N = k = momentum_proj(z), rows N:2N = k_a = momentum_proj(z_a)

    # multihead_attn with a single key/query position: softmax weight == 1, so
    # attn(query, kv, kv) = out_proj(v_proj(kv)), independent of the query.
    bv = vmha_ref[0:1, :]
    bo = vmha_ref[1:2, :]
    v = jnp.dot(k_all, wv_ref[...], preferred_element_type=jnp.float32) + bv
    att = jnp.dot(v, wo_ref[...], preferred_element_type=jnp.float32) + bo
    # att rows 0:N = attn(q_a, k, k),  rows N:2N = attn(q, k_a, k_a)

    # InfoNCE: normalize rows, logits = qn @ kn^T / T, CE with labels = arange(N).
    def l2norm(x):
        nrm = jnp.sqrt(jnp.sum(x * x, axis=1, keepdims=True))
        return x / jnp.maximum(nrm, NORM_EPS)

    qn = l2norm(att)                                                    # (2N, H)
    kn = l2norm(k_all)                                                  # (2N, H)

    def infonce(qb, kb):
        logits = lax.dot_general(
            qb, kb, (((1,), (1,)), ((), ())),
            preferred_element_type=jnp.float32) * (1.0 / TEMP)          # (N, N)
        mmax = jnp.max(logits, axis=1, keepdims=True)
        lse = mmax + jnp.log(jnp.sum(jnp.exp(logits - mmax), axis=1, keepdims=True))
        # diag(qn @ kn^T) is just the row-wise dot product.
        diag = jnp.sum(qb * kb, axis=1, keepdims=True) * (1.0 / TEMP)
        return jnp.mean(lse - diag, keepdims=True)                      # (1, 1)

    # loss(q_att, k_a) + loss(q_a_att, k)
    o_ref[...] = infonce(qn[N:, :], kn[N:, :]) + infonce(qn[:N, :], kn[:N, :])


# ---------------------------------------------------------------------------
# Wrapper: pack small bias vectors, single pallas_call
# ---------------------------------------------------------------------------
@jax.jit
def contrastive_head_forward(z, z_a, stu, mom, mha):
    # Pack per-head (1, H) vectors into one ref each to cut operand/DMA count.
    def pack_proj(p):
        return jnp.concatenate([p["b1"], p["gamma"], p["beta"], p["b2"]], axis=0)  # (4, H)

    vec_s = pack_proj(stu)
    vec_m = pack_proj(mom)
    vec_mha = jnp.concatenate([mha["bv"], mha["bo"]], axis=0)                      # (2, H)

    vmem = lambda: pl.BlockSpec(memory_space=pltpu.MemorySpace.VMEM)
    out = pl.pallas_call(
        _contrastive_head_kernel,
        out_shape=jax.ShapeDtypeStruct((1, 1), jnp.float32),
        in_specs=[vmem() for _ in range(11)],
        out_specs=vmem(),
    )(z, z_a,
      stu["w1"], stu["w2"], vec_s,
      mom["w1"], mom["w2"], vec_m,
      mha["wv"], mha["wo"], vec_mha)
    # NOTE: the PyTorch module mutates momentum params in place; the updated
    # teacher params are not returned here (forward value is unaffected).
    return out[0, 0]


if __name__ == "__main__":
    key = jax.random.PRNGKey(0)
    keys = jax.random.split(key, 12)

    def init(k, shape, scale=0.1):
        return scale * jax.random.normal(k, shape, dtype=jnp.float32)

    # student projection head params (weights stored (in, out); biases (1, C))
    stu = {
        "w1": init(keys[0], (N_H, HIDDEN)),
        "b1": init(keys[1], (1, HIDDEN)),
        "gamma": jnp.ones((1, HIDDEN), jnp.float32),
        "beta": jnp.zeros((1, HIDDEN), jnp.float32),
        "w2": init(keys[2], (HIDDEN, HIDDEN)),
        "b2": init(keys[3], (1, HIDDEN)),
    }
    # momentum (teacher) head: exact copy of the student (._init_momentum)
    mom = jax.tree_util.tree_map(lambda x: x, stu)

    # multihead attention params.  wq/wk/bq/bk are value-dead (softmax over a
    # single key == 1) and therefore not consumed by the kernel.
    mha = {
        "wq": init(keys[4], (HIDDEN, HIDDEN)),
        "wk": init(keys[5], (HIDDEN, HIDDEN)),
        "wv": init(keys[6], (HIDDEN, HIDDEN)),
        "bq": jnp.zeros((1, HIDDEN), jnp.float32),
        "bk": jnp.zeros((1, HIDDEN), jnp.float32),
        "bv": jnp.zeros((1, HIDDEN), jnp.float32),
        "wo": init(keys[7], (HIDDEN, HIDDEN)),
        "bo": jnp.zeros((1, HIDDEN), jnp.float32),
    }

    z = jax.random.normal(keys[8], (N, N_H), jnp.float32)
    z_a = jax.random.normal(keys[9], (N, N_H), jnp.float32)

    loss = contrastive_head_forward(z, z_a, stu, mom, mha)
    loss = jax.block_until_ready(loss)
    assert loss.shape == () and jnp.isfinite(loss)
    print("KERNEL_OK")
</pallas_src>

<mosaic_0001>
module attributes {stable_mosaic.version = 11 : i64} {
  func.func @_contrastive_head_kernel(%arg0: memref<8x16xf32, #tpu.memory_space<vmem>>, %arg1: memref<8x16xf32, #tpu.memory_space<vmem>>, %arg2: memref<16x32xf32, #tpu.memory_space<vmem>>, %arg3: memref<32x32xf32, #tpu.memory_space<vmem>>, %arg4: memref<4x32xf32, #tpu.memory_space<vmem>>, %arg5: memref<16x32xf32, #tpu.memory_space<vmem>>, %arg6: memref<32x32xf32, #tpu.memory_space<vmem>>, %arg7: memref<4x32xf32, #tpu.memory_space<vmem>>, %arg8: memref<32x32xf32, #tpu.memory_space<vmem>>, %arg9: memref<32x32xf32, #tpu.memory_space<vmem>>, %arg10: memref<2x32xf32, #tpu.memory_space<vmem>>, %arg11: memref<1x1xf32, #tpu.memory_space<vmem>>) attributes {dimension_semantics = [], scalar_prefetch = 0 : i64, scratch_operands = 0 : i64, tpu.core_type = #tpu.core_type<tc>} {
    %c0 = arith.constant 0 : index
    %c0_0 = arith.constant 0 : index
    %0 = vector.load %arg0[%c0, %c0_0] : memref<8x16xf32, #tpu.memory_space<vmem>>, vector<8x16xf32>
    %c0_1 = arith.constant 0 : index
    %c0_2 = arith.constant 0 : index
    %1 = vector.load %arg1[%c0_1, %c0_2] : memref<8x16xf32, #tpu.memory_space<vmem>>, vector<8x16xf32>
    %2 = tpu.concatenate %0, %1 in 0 : vector<8x16xf32>, vector<8x16xf32> -> vector<16x16xf32>
    %c0_3 = arith.constant 0 : index
    %c0_4 = arith.constant 0 : index
    %3 = vector.load %arg5[%c0_3, %c0_4] : memref<16x32xf32, #tpu.memory_space<vmem>>, vector<16x32xf32>
    %cst = arith.constant 9.990000e-01 : f32
    %4 = vector.broadcast %cst : f32 to vector<16x32xf32>
    %5 = arith.mulf %4, %3 : vector<16x32xf32>
    %c0_5 = arith.constant 0 : index
    %c0_6 = arith.constant 0 : index
    %6 = vector.load %arg2[%c0_5, %c0_6] : memref<16x32xf32, #tpu.memory_space<vmem>>, vector<16x32xf32>
    %cst_7 = arith.constant 1.000000e-03 : f32
    %7 = vector.broadcast %cst_7 : f32 to vector<16x32xf32>
    %8 = arith.mulf %7, %6 : vector<16x32xf32>
    %9 = arith.addf %5, %8 : vector<16x32xf32>
    %c0_8 = arith.constant 0 : index
    %c0_9 = arith.constant 0 : index
    %10 = vector.load %arg6[%c0_8, %c0_9] : memref<32x32xf32, #tpu.memory_space<vmem>>, vector<32x32xf32>
    %cst_10 = arith.constant 9.990000e-01 : f32
    %11 = vector.broadcast %cst_10 : f32 to vector<32x32xf32>
    %12 = arith.mulf %11, %10 : vector<32x32xf32>
    %c0_11 = arith.constant 0 : index
    %c0_12 = arith.constant 0 : index
    %13 = vector.load %arg3[%c0_11, %c0_12] : memref<32x32xf32, #tpu.memory_space<vmem>>, vector<32x32xf32>
    %cst_13 = arith.constant 1.000000e-03 : f32
    %14 = vector.broadcast %cst_13 : f32 to vector<32x32xf32>
    %15 = arith.mulf %14, %13 : vector<32x32xf32>
    %16 = arith.addf %12, %15 : vector<32x32xf32>
    %c0_14 = arith.constant 0 : index
    %c0_15 = arith.constant 0 : index
    %17 = vector.load %arg7[%c0_14, %c0_15] : memref<4x32xf32, #tpu.memory_space<vmem>>, vector<4x32xf32>
    %cst_16 = arith.constant 9.990000e-01 : f32
    %18 = vector.broadcast %cst_16 : f32 to vector<4x32xf32>
    %19 = arith.mulf %18, %17 : vector<4x32xf32>
    %c0_17 = arith.constant 0 : index
    %c0_18 = arith.constant 0 : index
    %20 = vector.load %arg4[%c0_17, %c0_18] : memref<4x32xf32, #tpu.memory_space<vmem>>, vector<4x32xf32>
    %cst_19 = arith.constant 1.000000e-03 : f32
    %21 = vector.broadcast %cst_19 : f32 to vector<4x32xf32>
    %22 = arith.mulf %21, %20 : vector<4x32xf32>
    %23 = arith.addf %19, %22 : vector<4x32xf32>
    %cst_20 = arith.constant dense<0.000000e+00> : vector<16x32xf32>
    %24 = tpu.matmul %2, %9, %cst_20 {dimension_numbers = #tpu.dot_dimension_numbers<[1], [0], [0], [1], [0, 0, 1, 1], [], []>} : vector<16x16xf32>, vector<16x32xf32>, vector<16x32xf32> -> vector<16x32xf32>
    %25 = vector.extract_strided_slice %23 {offsets = [0, 0], sizes = [1, 32], strides = [1, 1]} : vector<4x32xf32> to vector<1x32xf32>
    %26 = vector.broadcast %25 : vector<1x32xf32> to vector<16x32xf32>
    %27 = arith.addf %24, %26 : vector<16x32xf32>
    %28 = vector.extract_strided_slice %27 {offsets = [0, 0], sizes = [8, 32], strides = [1, 1]} : vector<16x32xf32> to vector<8x32xf32>
    %cst_21 = arith.constant dense<0.000000e+00> : vector<32xf32>
    %29 = vector.multi_reduction <add>, %28, %cst_21 [0] : vector<8x32xf32> to vector<32xf32>
    %30 = vector.shape_cast %29 : vector<32xf32> to vector<1x32xf32>
    %cst_22 = arith.constant 8.000000e+00 : f32
    %31 = vector.broadcast %cst_22 : f32 to vector<1x32xf32>
    %32 = arith.divf %30, %31 : vector<1x32xf32>
    %33 = vector.broadcast %32 : vector<1x32xf32> to vector<8x32xf32>
    %34 = arith.subf %28, %33 : vector<8x32xf32>
    %35 = arith.mulf %34, %34 : vector<8x32xf32>
    %cst_23 = arith.constant dense<0.000000e+00> : vector<32xf32>
    %36 = vector.multi_reduction <add>, %35, %cst_23 [0] : vector<8x32xf32> to vector<32xf32>
    %37 = vector.shape_cast %36 : vector<32xf32> to vector<1x32xf32>
    %cst_24 = arith.constant 8.000000e+00 : f32
    %38 = vector.broadcast %cst_24 : f32 to vector<1x32xf32>
    %39 = arith.divf %37, %38 : vector<1x32xf32>
    %40 = vector.broadcast %32 : vector<1x32xf32> to vector<8x32xf32>
    %41 = arith.subf %28, %40 : vector<8x32xf32>
    %cst_25 = arith.constant 9.99999974E-6 : f32
    %42 = vector.broadcast %cst_25 : f32 to vector<1x32xf32>
    %43 = arith.addf %39, %42 : vector<1x32xf32>
    %44 = math.rsqrt %43 : vector<1x32xf32>
    %45 = vector.broadcast %44 : vector<1x32xf32> to vector<8x32xf32>
    %46 = arith.mulf %41, %45 : vector<8x32xf32>
    %47 = vector.extract_strided_slice %27 {offsets = [8, 0], sizes = [8, 32], strides = [1, 1]} : vector<16x32xf32> to vector<8x32xf32>
    %cst_26 = arith.constant dense<0.000000e+00> : vector<32xf32>
    %48 = vector.multi_reduction <add>, %47, %cst_26 [0] : vector<8x32xf32> to vector<32xf32>
    %49 = vector.shape_cast %48 : vector<32xf32> to vector<1x32xf32>
    %cst_27 = arith.constant 8.000000e+00 : f32
    %50 = vector.broadcast %cst_27 : f32 to vector<1x32xf32>
    %51 = arith.divf %49, %50 : vector<1x32xf32>
    %52 = vector.broadcast %51 : vector<1x32xf32> to vector<8x32xf32>
    %53 = arith.subf %47, %52 : vector<8x32xf32>
    %54 = arith.mulf %53, %53 : vector<8x32xf32>
    %cst_28 = arith.constant dense<0.000000e+00> : vector<32xf32>
    %55 = vector.multi_reduction <add>, %54, %cst_28 [0] : vector<8x32xf32> to vector<32xf32>
    %56 = vector.shape_cast %55 : vector<32xf32> to vector<1x32xf32>
    %cst_29 = arith.constant 8.000000e+00 : f32
    %57 = vector.broadcast %cst_29 : f32 to vector<1x32xf32>
    %58 = arith.divf %56, %57 : vector<1x32xf32>
    %59 = vector.broadcast %51 : vector<1x32xf32> to vector<8x32xf32>
    %60 = arith.subf %47, %59 : vector<8x32xf32>
    %cst_30 = arith.constant 9.99999974E-6 : f32
    %61 = vector.broadcast %cst_30 : f32 to vector<1x32xf32>
    %62 = arith.addf %58, %61 : vector<1x32xf32>
    %63 = math.rsqrt %62 : vector<1x32xf32>
    %64 = vector.broadcast %63 : vector<1x32xf32> to vector<8x32xf32>
    %65 = arith.mulf %60, %64 : vector<8x32xf32>
    %66 = tpu.concatenate %46, %65 in 0 : vector<8x32xf32>, vector<8x32xf32> -> vector<16x32xf32>
    %67 = vector.extract_strided_slice %23 {offsets = [1, 0], sizes = [1, 32], strides = [1, 1]} : vector<4x32xf32> to vector<1x32xf32>
    %68 = vector.broadcast %67 : vector<1x32xf32> to vector<16x32xf32>
    %69 = arith.mulf %66, %68 : vector<16x32xf32>
    %70 = vector.extract_strided_slice %23 {offsets = [2, 0], sizes = [1, 32], strides = [1, 1]} : vector<4x32xf32> to vector<1x32xf32>
    %71 = vector.broadcast %70 : vector<1x32xf32> to vector<16x32xf32>
    %72 = arith.addf %69, %71 : vector<16x32xf32>
    %cst_31 = arith.constant 0.000000e+00 : f32
    %73 = vector.broadcast %cst_31 : f32 to vector<16x32xf32>
    %74 = arith.maximumf %72, %73 : vector<16x32xf32>
    %cst_32 = arith.constant dense<0.000000e+00> : vector<16x32xf32>
    %75 = tpu.matmul %74, %16, %cst_32 {dimension_numbers = #tpu.dot_dimension_numbers<[1], [0], [0], [1], [0, 0, 1, 1], [], []>} : vector<16x32xf32>, vector<32x32xf32>, vector<16x32xf32> -> vector<16x32xf32>
    %76 = vector.extract_strided_slice %23 {offsets = [3, 0], sizes = [1, 32], strides = [1, 1]} : vector<4x32xf32> to vector<1x32xf32>
    %77 = vector.broadcast %76 : vector<1x32xf32> to vector<16x32xf32>
    %78 = arith.addf %75, %77 : vector<16x32xf32>
    %c0_33 = arith.constant 0 : index
    %c0_34 = arith.constant 0 : index
    %79 = vector.load %arg10[%c0_33, %c0_34] : memref<2x32xf32, #tpu.memory_space<vmem>>, vector<1x32xf32>
    %c1 = arith.constant 1 : index
    %c0_35 = arith.constant 0 : index
    %80 = vector.load %arg10[%c1, %c0_35] : memref<2x32xf32, #tpu.memory_space<vmem>>, vector<1x32xf32>
    %c0_36 = arith.constant 0 : index
    %c0_37 = arith.constant 0 : index
    %81 = vector.load %arg8[%c0_36, %c0_37] : memref<32x32xf32, #tpu.memory_space<vmem>>, vector<32x32xf32>
    %cst_38 = arith.constant dense<0.000000e+00> : vector<16x32xf32>
    %82 = tpu.matmul %78, %81, %cst_38 {dimension_numbers = #tpu.dot_dimension_numbers<[1], [0], [0], [1], [0, 0, 1, 1], [], []>} : vector<16x32xf32>, vector<32x32xf32>, vector<16x32xf32> -> vector<16x32xf32>
    %83 = vector.broadcast %79 : vector<1x32xf32> to vector<16x32xf32>
    %84 = arith.addf %82, %83 : vector<16x32xf32>
    %c0_39 = arith.constant 0 : index
    %c0_40 = arith.constant 0 : index
    %85 = vector.load %arg9[%c0_39, %c0_40] : memref<32x32xf32, #tpu.memory_space<vmem>>, vector<32x32xf32>
    %cst_41 = arith.constant dense<0.000000e+00> : vector<16x32xf32>
    %86 = tpu.matmul %84, %85, %cst_41 {dimension_numbers = #tpu.dot_dimension_numbers<[1], [0], [0], [1], [0, 0, 1, 1], [], []>} : vector<16x32xf32>, vector<32x32xf32>, vector<16x32xf32> -> vector<16x32xf32>
    %87 = vector.broadcast %80 : vector<1x32xf32> to vector<16x32xf32>
    %88 = arith.addf %86, %87 : vector<16x32xf32>
    %89 = arith.mulf %88, %88 : vector<16x32xf32>
    %cst_42 = arith.constant dense<0.000000e+00> : vector<16xf32>
    %90 = vector.multi_reduction <add>, %89, %cst_42 [1] : vector<16x32xf32> to vector<16xf32>
    %91 = vector.shape_cast %90 : vector<16xf32> to vector<16x1xf32>
    %92 = math.sqrt %91 : vector<16x1xf32>
    %cst_43 = arith.constant 9.99999996E-13 : f32
    %93 = vector.broadcast %cst_43 : f32 to vector<16x1xf32>
    %94 = arith.maximumf %92, %93 : vector<16x1xf32>
    %95 = vector.broadcast %94 : vector<16x1xf32> to vector<16x32xf32>
    %96 = arith.divf %88, %95 : vector<16x32xf32>
    %97 = arith.mulf %78, %78 : vector<16x32xf32>
    %cst_44 = arith.constant dense<0.000000e+00> : vector<16xf32>
    %98 = vector.multi_reduction <add>, %97, %cst_44 [1] : vector<16x32xf32> to vector<16xf32>
    %99 = vector.shape_cast %98 : vector<16xf32> to vector<16x1xf32>
    %100 = math.sqrt %99 : vector<16x1xf32>
    %cst_45 = arith.constant 9.99999996E-13 : f32
    %101 = vector.broadcast %cst_45 : f32 to vector<16x1xf32>
    %102 = arith.maximumf %100, %101 : vector<16x1xf32>
    %103 = vector.broadcast %102 : vector<16x1xf32> to vector<16x32xf32>
    %104 = arith.divf %78, %103 : vector<16x32xf32>
    %105 = vector.extract_strided_slice %96 {offsets = [8, 0], sizes = [8, 32], strides = [1, 1]} : vector<16x32xf32> to vector<8x32xf32>
    %106 = vector.extract_strided_slice %104 {offsets = [8, 0], sizes = [8, 32], strides = [1, 1]} : vector<16x32xf32> to vector<8x32xf32>
    %cst_46 = arith.constant dense<0.000000e+00> : vector<8x8xf32>
    %107 = tpu.matmul %105, %106, %cst_46 {dimension_numbers = #tpu.dot_dimension_numbers<[1], [1], [0], [0], [0, 0, 1, 0], [], []>} : vector<8x32xf32>, vector<8x32xf32>, vector<8x8xf32> -> vector<8x8xf32>
    %cst_47 = arith.constant 14.2857141 : f32
    %108 = vector.broadcast %cst_47 : f32 to vector<8x8xf32>
    %109 = arith.mulf %107, %108 : vector<8x8xf32>
    %cst_48 = arith.constant dense<0xFF800000> : vector<8xf32>
    %110 = vector.multi_reduction <maximumf>, %109, %cst_48 [1] : vector<8x8xf32> to vector<8xf32>
    %111 = vector.shape_cast %110 : vector<8xf32> to vector<8x1xf32>
    %112 = vector.broadcast %111 : vector<8x1xf32> to vector<8x8xf32>
    %113 = arith.subf %109, %112 : vector<8x8xf32>
    %114 = math.exp %113 : vector<8x8xf32>
    %cst_49 = arith.constant dense<0.000000e+00> : vector<8xf32>
    %115 = vector.multi_reduction <add>, %114, %cst_49 [1] : vector<8x8xf32> to vector<8xf32>
    %116 = vector.shape_cast %115 : vector<8xf32> to vector<8x1xf32>
    %117 = math.log %116 : vector<8x1xf32>
    %118 = arith.addf %111, %117 : vector<8x1xf32>
    %119 = arith.mulf %105, %106 : vector<8x32xf32>
    %cst_50 = arith.constant dense<0.000000e+00> : vector<8xf32>
    %120 = vector.multi_reduction <add>, %119, %cst_50 [1] : vector<8x32xf32> to vector<8xf32>
    %121 = vector.shape_cast %120 : vector<8xf32> to vector<8x1xf32>
    %cst_51 = arith.constant 14.2857141 : f32
    %122 = vector.broadcast %cst_51 : f32 to vector<8x1xf32>
    %123 = arith.mulf %121, %122 : vector<8x1xf32>
    %124 = arith.subf %118, %123 : vector<8x1xf32>
    %125 = vector.shape_cast %124 : vector<8x1xf32> to vector<1x8x1xf32>
    %cst_52 = arith.constant dense<0.000000e+00> : vector<1xf32>
    %126 = vector.multi_reduction <add>, %125, %cst_52 [1, 2] : vector<1x8x1xf32> to vector<1xf32>
    %127 = vector.shape_cast %126 : vector<1xf32> to vector<1x1x1xf32>
    %128 = vector.extract %127[0, 0, 0] : f32 from vector<1x1x1xf32>
    %129 = vector.broadcast %128 : f32 to vector<1x1xf32>
    %cst_53 = arith.constant 8.000000e+00 : f32
    %130 = vector.broadcast %cst_53 : f32 to vector<1x1xf32>
    %131 = arith.divf %129, %130 : vector<1x1xf32>
    %132 = vector.extract_strided_slice %96 {offsets = [0, 0], sizes = [8, 32], strides = [1, 1]} : vector<16x32xf32> to vector<8x32xf32>
    %133 = vector.extract_strided_slice %104 {offsets = [0, 0], sizes = [8, 32], strides = [1, 1]} : vector<16x32xf32> to vector<8x32xf32>
    %cst_54 = arith.constant dense<0.000000e+00> : vector<8x8xf32>
    %134 = tpu.matmul %132, %133, %cst_54 {dimension_numbers = #tpu.dot_dimension_numbers<[1], [1], [0], [0], [0, 0, 1, 0], [], []>} : vector<8x32xf32>, vector<8x32xf32>, vector<8x8xf32> -> vector<8x8xf32>
    %cst_55 = arith.constant 14.2857141 : f32
    %135 = vector.broadcast %cst_55 : f32 to vector<8x8xf32>
    %136 = arith.mulf %134, %135 : vector<8x8xf32>
    %cst_56 = arith.constant dense<0xFF800000> : vector<8xf32>
    %137 = vector.multi_reduction <maximumf>, %136, %cst_56 [1] : vector<8x8xf32> to vector<8xf32>
    %138 = vector.shape_cast %137 : vector<8xf32> to vector<8x1xf32>
    %139 = vector.broadcast %138 : vector<8x1xf32> to vector<8x8xf32>
    %140 = arith.subf %136, %139 : vector<8x8xf32>
    %141 = math.exp %140 : vector<8x8xf32>
    %cst_57 = arith.constant dense<0.000000e+00> : vector<8xf32>
    %142 = vector.multi_reduction <add>, %141, %cst_57 [1] : vector<8x8xf32> to vector<8xf32>
    %143 = vector.shape_cast %142 : vector<8xf32> to vector<8x1xf32>
    %144 = math.log %143 : vector<8x1xf32>
    %145 = arith.addf %138, %144 : vector<8x1xf32>
    %146 = arith.mulf %132, %133 : vector<8x32xf32>
    %cst_58 = arith.constant dense<0.000000e+00> : vector<8xf32>
    %147 = vector.multi_reduction <add>, %146, %cst_58 [1] : vector<8x32xf32> to vector<8xf32>
    %148 = vector.shape_cast %147 : vector<8xf32> to vector<8x1xf32>
    %cst_59 = arith.constant 14.2857141 : f32
    %149 = vector.broadcast %cst_59 : f32 to vector<8x1xf32>
    %150 = arith.mulf %148, %149 : vector<8x1xf32>
    %151 = arith.subf %145, %150 : vector<8x1xf32>
    %152 = vector.shape_cast %151 : vector<8x1xf32> to vector<1x8x1xf32>
    %cst_60 = arith.constant dense<0.000000e+00> : vector<1xf32>
    %153 = vector.multi_reduction <add>, %152, %cst_60 [1, 2] : vector<1x8x1xf32> to vector<1xf32>
    %154 = vector.shape_cast %153 : vector<1xf32> to vector<1x1x1xf32>
    %155 = vector.extract %154[0, 0, 0] : f32 from vector<1x1x1xf32>
    %156 = vector.broadcast %155 : f32 to vector<1x1xf32>
    %cst_61 = arith.constant 8.000000e+00 : f32
    %157 = vector.broadcast %cst_61 : f32 to vector<1x1xf32>
    %158 = arith.divf %156, %157 : vector<1x1xf32>
    %159 = arith.addf %131, %158 : vector<1x1xf32>
    %c0_62 = arith.constant 0 : index
    %c0_63 = arith.constant 0 : index
    %160 = vector.load %arg11[%c0_62, %c0_63] : memref<1x1xf32, #tpu.memory_space<vmem>>, vector<1x1xf32>
    tpu.vector_store %arg11[%c0_62, %c0_63], %159 {strides = array<i32>} : memref<1x1xf32, #tpu.memory_space<vmem>>, vector<1x1xf32>,
    return
  }
}

</mosaic_0001>

<llo_original>
// kernel: contrastive_head_forward.1
$region0: #{contrastive_head_forward.1}
  #allocation0 [shape = 'u32[]', space=smem, size = 0x4, offset = 0x4, fixed_abs, tag = 'smem constant byte address 0x4 - core index']
  #allocation1 [shape = 'u32[144,128]{1,0:T(1,128)}', space=vmem, size = 0x12000, scoped, tag = 'internal scratch']
  %s0 = inlined_call_operand.hbm [shape: f32[8,16], index: 0, kind: input, shape index: {}]
  %s1 = inlined_call_operand.hbm [shape: f32[8,16], index: 1, kind: input, shape index: {}]
  %s2 = inlined_call_operand.hbm [shape: f32[16,32], index: 2, kind: input, shape index: {}]
  %s3 = inlined_call_operand.vmem [shape: f32[32,32], index: 3, kind: input, shape index: {}]
  %s4 = inlined_call_operand.vmem [shape: f32[4,32], index: 4, kind: input, shape index: {}]
  %s5 = inlined_call_operand.hbm [shape: f32[16,32], index: 5, kind: input, shape index: {}]
  %s6 = inlined_call_operand.vmem [shape: f32[32,32], index: 6, kind: input, shape index: {}]
  %s7 = inlined_call_operand.vmem [shape: f32[4,32], index: 7, kind: input, shape index: {}]
  %s8 = inlined_call_operand.hbm [shape: f32[32,32], index: 8, kind: input, shape index: {}]
  %s9 = inlined_call_operand.hbm [shape: f32[32,32], index: 9, kind: input, shape index: {}]
  %s10 = inlined_call_operand.vmem [shape: f32[2,32], index: 10, kind: input, shape index: {}]
  %s11 = inlined_call_operand.hbm [shape: f32[1,1], index: 11, kind: output, shape index: {}]
  %s12 = sld [smem:[#allocation0]]
  $region78: #{contrastive_head_forward.1} parent=0
    _
  %s14 = ssub.s32 1, %s12
  %s15 = scalar_select 0, %s14, %s12
  $region1: #{contrastive_head_forward.1} parent=0
    #allocation2 [shape = 'u8[4096]{0}', space=vmem, size = 0x1000, scoped, tag = 'input window, operand 0, single buffered']
    #allocation3 [shape = 's32[1]{0}', space=sflag, size = 0x4, scoped, tag = 'scoped memory for contrastive_head_forward.1']
    #allocation4 [shape = 's32[1]{0}', space=sflag, size = 0x4, scoped, tag = 'scoped memory for contrastive_head_forward.1']
    #allocation5 [shape = 'u8[4096]{0}', space=vmem, size = 0x1000, scoped, tag = 'input window, operand 1, single buffered']
    #allocation6 [shape = 's32[1]{0}', space=sflag, size = 0x4, scoped, tag = 'scoped memory for contrastive_head_forward.1']
    #allocation7 [shape = 'u8[8192]{0}', space=vmem, size = 0x2000, scoped, tag = 'input window, operand 2, single buffered']
    #allocation8 [shape = 'u8[8192]{0}', space=vmem, size = 0x2000, scoped, tag = 'input window, operand 5, single buffered']
    #allocation9 [shape = 's32[1]{0}', space=sflag, size = 0x4, scoped, tag = 'scoped memory for contrastive_head_forward.1']
    #allocation10 [shape = 'u8[16384]{0}', space=vmem, size = 0x4000, scoped, tag = 'input window, operand 8, single buffered']
    #allocation11 [shape = 'u8[16384]{0}', space=vmem, size = 0x4000, scoped, tag = 'input window, operand 9, single buffered']
    #allocation12 [shape = 's32[1]{0}', space=sflag, size = 0x4, scoped, tag = 'scoped memory for contrastive_head_forward.1']
    #allocation13 [shape = 'u8[512]{0}', space=vmem, size = 0x400, scoped, tag = 'output window, operand 0, single buffered']
    %16 = vsyncpa [#allocation3], 0
    %17 = vsyncpa [#allocation6], 0
    %18 = vsyncpa [#allocation9], 0
    %19 = vsyncpa [#allocation12], 0
    %20 = vsyncpa [#allocation4], 0
    // Predicated region
    $region2: #{contrastive_head_forward.1} parent=1 // pred_check
      _
    $region3: #{contrastive_head_forward.1} parent=1 // pred_check_branch
      %22 = sbr.rel (0) target = $region5
    $region4: #{contrastive_head_forward.1} parent=1 // pred_region
      %s24 = ssub.s32 128, 128
      %25 = vsyncadd [#allocation3], %s24
      %s27 = sshll.u32 [#allocation2], 4
      %s28 = int_to_ptr.vmem [resolvable:$true] %s27
      %30 = dma.hbm_to_vmem [thread:$0]  %s0, 128, %s28, [#allocation3]
    $region5: #{contrastive_head_forward.1} parent=1 // pred_fallthru
      _
    // Predicated region
    $region6: #{contrastive_head_forward.1} parent=1 // pred_check
      _
    $region7: #{contrastive_head_forward.1} parent=1 // pred_check_branch
      %32 = sbr.rel (0) target = $region9
    $region8: #{contrastive_head_forward.1} parent=1 // pred_region
      %s34 = ssub.s32 128, 128
      %35 = vsyncadd [#allocation6], %s34
      %s37 = sshll.u32 [#allocation5], 4
      %s38 = int_to_ptr.vmem [resolvable:$true] %s37
      %40 = dma.hbm_to_vmem [thread:$0]  %s1, 128, %s38, [#allocation6]
    $region9: #{contrastive_head_forward.1} parent=1 // pred_fallthru
      _
    // Predicated region
    $region10: #{contrastive_head_forward.1} parent=1 // pred_check
      _
    $region11: #{contrastive_head_forward.1} parent=1 // pred_check_branch
      %42 = sbr.rel (0) target = $region13
    $region12: #{contrastive_head_forward.1} parent=1 // pred_region
      %s44 = ssub.s32 256, 256
      %45 = vsyncadd [#allocation6], %s44
      %s46 = sshll.u32 [#allocation7], 4
      %s47 = int_to_ptr.vmem [resolvable:$true] %s46
      %52 = dma.hbm_to_vmem [thread:$0]  %s2, 256, %s47, [#allocation6], 128, 128, 8
    $region13: #{contrastive_head_forward.1} parent=1 // pred_fallthru
      _
    // Predicated region
    $region14: #{contrastive_head_forward.1} parent=1 // pred_check
      _
    $region15: #{contrastive_head_forward.1} parent=1 // pred_check_branch
      %54 = sbr.rel (0) target = $region17
    $region16: #{contrastive_head_forward.1} parent=1 // pred_region
      _
    $region17: #{contrastive_head_forward.1} parent=1 // pred_fallthru
      _
    // Predicated region
    $region18: #{contrastive_head_forward.1} parent=1 // pred_check
      _
    $region19: #{contrastive_head_forward.1} parent=1 // pred_check_branch
      %56 = sbr.rel (0) target = $region21
    $region20: #{contrastive_head_forward.1} parent=1 // pred_region
      _
    $region21: #{contrastive_head_forward.1} parent=1 // pred_fallthru
      _
    // Predicated region
    $region22: #{contrastive_head_forward.1} parent=1 // pred_check
      _
    $region23: #{contrastive_head_forward.1} parent=1 // pred_check_branch
      %58 = sbr.rel (0) target = $region25
    $region24: #{contrastive_head_forward.1} parent=1 // pred_region
      %s60 = ssub.s32 256, 256
      %61 = vsyncadd [#allocation9], %s60
      %s62 = sshll.u32 [#allocation8], 4
      %s63 = int_to_ptr.vmem [resolvable:$true] %s62
      %68 = dma.hbm_to_vmem [thread:$0]  %s5, 256, %s63, [#allocation9], 128, 128, 8
    $region25: #{contrastive_head_forward.1} parent=1 // pred_fallthru
      _
    // Predicated region
    $region26: #{contrastive_head_forward.1} parent=1 // pred_check
      _
    $region27: #{contrastive_head_forward.1} parent=1 // pred_check_branch
      %70 = sbr.rel (0) target = $region29
    $region28: #{contrastive_head_forward.1} parent=1 // pred_region
      _
    $region29: #{contrastive_head_forward.1} parent=1 // pred_fallthru
      _
    // Predicated region
    $region30: #{contrastive_head_forward.1} parent=1 // pred_check
      _
    $region31: #{contrastive_head_forward.1} parent=1 // pred_check_branch
      %72 = sbr.rel (0) target = $region33
    $region32: #{contrastive_head_forward.1} parent=1 // pred_region
      _
    $region33: #{contrastive_head_forward.1} parent=1 // pred_fallthru
      _
    // Predicated region
    $region34: #{contrastive_head_forward.1} parent=1 // pred_check
      _
    $region35: #{contrastive_head_forward.1} parent=1 // pred_check_branch
      %74 = sbr.rel (0) target = $region37
    $region36: #{contrastive_head_forward.1} parent=1 // pred_region
      %s76 = ssub.s32 512, 512
      %77 = vsyncadd [#allocation9], %s76
      %s78 = sshll.u32 [#allocation10], 4
      %s79 = int_to_ptr.vmem [resolvable:$true] %s78
      %84 = dma.hbm_to_vmem [thread:$0]  %s8, 512, %s79, [#allocation9], 128, 128, 8
    $region37: #{contrastive_head_forward.1} parent=1 // pred_fallthru
      _
    // Predicated region
    $region38: #{contrastive_head_forward.1} parent=1 // pred_check
      _
    $region39: #{contrastive_head_forward.1} parent=1 // pred_check_branch
      %86 = sbr.rel (0) target = $region41
    $region40: #{contrastive_head_forward.1} parent=1 // pred_region
      %s88 = ssub.s32 512, 512
      %89 = vsyncadd [#allocation12], %s88
      %s90 = sshll.u32 [#allocation11], 4
      %s91 = int_to_ptr.vmem [resolvable:$true] %s90
      %96 = dma.hbm_to_vmem [thread:$0]  %s9, 512, %s91, [#allocation12], 128, 128, 8
    $region41: #{contrastive_head_forward.1} parent=1 // pred_fallthru
      _
    // Predicated region
    $region42: #{contrastive_head_forward.1} parent=1 // pred_check
      _
    $region43: #{contrastive_head_forward.1} parent=1 // pred_check_branch
      %98 = sbr.rel (0) target = $region45
    $region44: #{contrastive_head_forward.1} parent=1 // pred_region
      _
    $region45: #{contrastive_head_forward.1} parent=1 // pred_fallthru
      _
    // Predicated region
    $region46: #{contrastive_head_forward.1} parent=1 // pred_check
      _
    $region47: #{contrastive_head_forward.1} parent=1 // pred_check_branch
      %100 = sbr.rel (0) target = $region49
    $region48: #{contrastive_head_forward.1} parent=1 // pred_region
      %101 = dma.done [#allocation3], 128
    $region49: #{contrastive_head_forward.1} parent=1 // pred_fallthru
      _
    // Predicated region
    $region50: #{contrastive_head_forward.1} parent=1 // pred_check
      _
    $region51: #{contrastive_head_forward.1} parent=1 // pred_check_branch
      %103 = sbr.rel (0) target = $region53
    $region52: #{contrastive_head_forward.1} parent=1 // pred_region
      %104 = dma.done [#allocation6], 128
    $region53: #{contrastive_head_forward.1} parent=1 // pred_fallthru
      _
    // Predicated region
    $region54: #{contrastive_head_forward.1} parent=1 // pred_check
      _
    $region55: #{contrastive_head_forward.1} parent=1 // pred_check_branch
      %106 = sbr.rel (0) target = $region57
    $region56: #{contrastive_head_forward.1} parent=1 // pred_region
      %107 = dma.done [#allocation6], 256
    $region57: #{contrastive_head_forward.1} parent=1 // pred_fallthru
      _
    // Predicated region
    $region58: #{contrastive_head_forward.1} parent=1 // pred_check
      _
    $region59: #{contrastive_head_forward.1} parent=1 // pred_check_branch
      %109 = sbr.rel (0) target = $region61
    $region60: #{contrastive_head_forward.1} parent=1 // pred_region
      %110 = dma.done [#allocation9], 256
    $region61: #{contrastive_head_forward.1} parent=1 // pred_fallthru
      _
    // Predicated region
    $region62: #{contrastive_head_forward.1} parent=1 // pred_check
      _
    $region63: #{contrastive_head_forward.1} parent=1 // pred_check_branch
      %112 = sbr.rel (0) target = $region65
    $region64: #{contrastive_head_forward.1} parent=1 // pred_region
      %113 = dma.done [#allocation9], 512
    $region65: #{contrastive_head_forward.1} parent=1 // pred_fallthru
      _
    // Predicated region
    $region66: #{contrastive_head_forward.1} parent=1 // pred_check
      _
    $region67: #{contrastive_head_forward.1} parent=1 // pred_check_branch
      %115 = sbr.rel (0) target = $region69
    $region68: #{contrastive_head_forward.1} parent=1 // pred_region
      %116 = dma.done [#allocation12], 512
    $region69: #{contrastive_head_forward.1} parent=1 // pred_fallthru
      _
    %v117 = vld [vmem:[#allocation2] sm:$0xff]
    %v118 = vld [vmem:[#allocation5] sm:$0xff]
    %v119 = vld [vmem:[#allocation8] sm:$0xff]
    %v120 = vld [vmem:[#allocation8 + $0x8] sm:$0xff]
    %v121 = vmul.f32 %v119, 0.999
    %v122 = vmul.f32 %v120, 0.999
    %v123 = vld [vmem:[#allocation7] sm:$0xff]
    %v124 = vld [vmem:[#allocation7 + $0x8] sm:$0xff]
    %v125 = vmul.f32 %v123, 0.001
    %v126 = vmul.f32 %v124, 0.001
    %v127 = vadd.f32 %v121, %v125
    %v128 = vadd.f32 %v122, %v126
    %v129 = vld [vmem:[%s6] sm:$0xff]
    %v130 = vld [vmem:[%s6 + $0x8] sm:$0xff]
    %v131 = vld [vmem:[%s6 + $0x10] sm:$0xff]
    %v132 = vld [vmem:[%s6 + $0x18] sm:$0xff]
    %v133 = vmul.f32 %v129, 0.999
    %v134 = vmul.f32 %v130, 0.999
    %v135 = vmul.f32 %v131, 0.999
    %v136 = vmul.f32 %v132, 0.999
    %v137 = vld [vmem:[%s3] sm:$0xff]
    %v138 = vld [vmem:[%s3 + $0x8] sm:$0xff]
    %v139 = vld [vmem:[%s3 + $0x10] sm:$0xff]
    %v140 = vld [vmem:[%s3 + $0x18] sm:$0xff]
    %v141 = vmul.f32 %v137, 0.001
    %v142 = vmul.f32 %v138, 0.001
    %v143 = vmul.f32 %v139, 0.001
    %v144 = vmul.f32 %v140, 0.001
    %v145 = vadd.f32 %v133, %v141
    %v146 = vadd.f32 %v134, %v142
    %v147 = vadd.f32 %v135, %v143
    %v148 = vadd.f32 %v136, %v144
    %v149 = vld [vmem:[%s7] sm:$0xf]
    %v150 = vmul.f32 %v149, 0.999
    %v151 = vld [vmem:[%s4] sm:$0xf]
    %v152 = vmul.f32 %v151, 0.001
    %v153 = vadd.f32 %v150, %v152
    %v154 = vlaneseq
    %v155 = vshrl.u32 %v154, 7
    %v156 = vsub.s32 0, %v155
    %v157 = vrot.slane %v153, %v156
    %vm158 = vcmask 130048
    %v160 = vsel %vm158, %v117, 0
    %v163 = vsel %vm158, %v118, 0
    %165 = vmatprep.subr.mxu0 0.0
    %166 = vmatpush1.msra.mxu0 %v127
    %167 = vmatprep.subr.mxu0 0.0
    %168 = vmatpush1.msra.mxu0 %v128
    %169 = vmatprep.subr.mxu0 0.0
    %170 = vmatpush1.msra.mxu0 0.0
    %171 = vmatprep.subr.mxu0 0.0
    %172 = vmatpush1.msra.mxu0 0.0
    %173 = vmatprep.subr.mxu0 0.0
    %174 = vmatpush1.msra.mxu0 0.0
    %175 = vmatprep.subr.mxu0 0.0
    %176 = vmatpush1.msra.mxu0 0.0
    %177 = vmatprep.subr.mxu0 0.0
    %178 = vmatpush1.msra.mxu0 0.0
    %179 = vmatprep.subr.mxu0 0.0
    %180 = vmatpush1.msra.mxu0 0.0
    %181 = vmatprep.subr.mxu0 0.0
    %182 = vmatpush1.msra.mxu0 0.0
    %183 = vmatprep.subr.mxu0 0.0
    %184 = vmatpush1.msra.mxu0 0.0
    %185 = vmatprep.subr.mxu0 0.0
    %186 = vmatpush1.msra.mxu0 0.0
    %187 = vmatprep.subr.mxu0 0.0
    %188 = vmatpush1.msra.mxu0 0.0
    %189 = vmatprep.subr.mxu0 0.0
    %190 = vmatpush1.msra.mxu0 0.0
    %191 = vmatprep.subr.mxu0 0.0
    %192 = vmatpush1.msra.mxu0 0.0
    %193 = vmatprep.subr.mxu0 0.0
    %194 = vmatpush1.msra.mxu0 0.0
    %195 = vmatprep.subr.mxu0 0.0
    %196 = vmatpush1.msra.mxu0 0.0
    %197 = vmatprep.subr.mxu0 0.0
    %198 = vmatpush1.msra.mxu0 0.0
    %199 = vmatprep.subr.mxu0 0.0
    %200 = vmatpush1.msra.mxu0 0.0
    %201 = vmatprep.subr.mxu0 0.0
    %202 = vmatpush1.msra.mxu0 0.0
    %203 = vmatprep.subr.mxu0 0.0
    %204 = vmatpush1.msra.mxu0 0.0
    %205 = vmatprep.subr.mxu0 0.0
    %206 = vmatpush1.msra.mxu0 0.0
    %207 = vmatprep.subr.mxu0 0.0
    %208 = vmatpush1.msra.mxu0 0.0
    %209 = vmatprep.subr.mxu0 0.0
    %210 = vmatpush1.msra.mxu0 0.0
    %211 = vmatprep.subr.mxu0 0.0
    %212 = vmatpush1.msra.mxu0 0.0
    %213 = vmatprep.subr.mxu0 0.0
    %214 = vmatpush1.msra.mxu0 0.0
    %215 = vmatprep.subr.mxu0 0.0
    %216 = vmatpush1.msra.mxu0 0.0
    %217 = vmatprep.subr.mxu0 0.0
    %218 = vmatpush1.msra.mxu0 0.0
    %219 = vmatprep.subr.mxu0 0.0
    %220 = vmatpush1.msra.mxu0 0.0
    %221 = vmatprep.subr.mxu0 0.0
    %222 = vmatpush1.msra.mxu0 0.0
    %223 = vmatprep.subr.mxu0 0.0
    %224 = vmatpush1.msra.mxu0 0.0
    %225 = vmatprep.subr.mxu0 0.0
    %226 = vmatpush1.msra.mxu0 0.0
    %227 = vmatprep.subr.mxu0 0.0
    %228 = vmatpush1.msra.mxu0 0.0
    %229 = vmatprep.mubr.f32.mxu0 0.0
    %230 = vmatmul.mubr.f32.gmra.mrb[0].mxu0 %v160
    %v231 = vpop.f32.mrb[0].mxu0
    %v232 = vadd.f32 %v157, %v231
    %v233 = vpop.f32.mrb[0].mxu0
    %234 = vmatprep.mubr.f32.mxu0 0.0
    %235 = vmatmul.mubr.f32.gmra.mrb[0].mxu0 %v163
    %v236 = vpop.f32.mrb[0].mxu0
    %v237 = vadd.f32 %v157, %v236
    %v238 = vpop.f32.mrb[0].mxu0
    %239 = vdwg.mxu0
    %vm240 = vcmask 261120
    %v241 = vsel %vm240, %v232, 0.0
    %v242 = vrot.slane %v241, 4
    %v243 = vadd.f32 %v241, %v242
    %v244 = vrot.slane %v243, 2
    %v245 = vadd.f32 %v243, %v244
    %v246 = vrot.slane %v245, 1
    %v247 = vadd.f32 %v245, %v246
    %v248 = vrcp.pop 8.0
    %v249 = vmul.f32 %v247, %v248
    %v250 = vsub.f32 %v232, %v249
    %v251 = vmul.f32 %v250, %v250
    %v252 = vsel %vm240, %v251, 0.0
    %v253 = vrot.slane %v252, 4
    %v254 = vadd.f32 %v252, %v253
    %v255 = vrot.slane %v254, 2
    %v256 = vadd.f32 %v254, %v255
    %v257 = vrot.slane %v256, 1
    %v258 = vadd.f32 %v256, %v257
    %v259 = vmul.f32 %v258, %v248
    %v260 = vadd.f32 %v259, 1e-05
    %v261 = vrsqrt.pop %v260
    %v262 = vmul.f32 %v250, %v261
    %v263 = vsel %vm240, %v237, 0.0
    %v264 = vrot.slane %v263, 4
    %v265 = vadd.f32 %v263, %v264
    %v266 = vrot.slane %v265, 2
    %v267 = vadd.f32 %v265, %v266
    %v268 = vrot.slane %v267, 1
    %v269 = vadd.f32 %v267, %v268
    %v270 = vmul.f32 %v269, %v248
    %v271 = vsub.f32 %v237, %v270
    %v272 = vmul.f32 %v271, %v271
    %v273 = vsel %vm240, %v272, 0.0
    %v274 = vrot.slane %v273, 4
    %v275 = vadd.f32 %v273, %v274
    %v276 = vrot.slane %v275, 2
    %v277 = vadd.f32 %v275, %v276
    %v278 = vrot.slane %v277, 1
    %v279 = vadd.f32 %v277, %v278
    %v280 = vmul.f32 %v279, %v248
    %v281 = vadd.f32 %v280, 1e-05
    %v282 = vrsqrt.pop %v281
    %v283 = vmul.f32 %v271, %v282
    %v284 = vlaneseq
    %v285 = vshrl.u32 %v284, 7
    %v286 = vsub.s32 1, %v285
    %v287 = vrot.slane %v153, %v286
    %v288 = vmul.f32 %v262, %v287
    %v289 = vmul.f32 %v283, %v287
    %v290 = vlaneseq
    %v291 = vshrl.u32 %v290, 7
    %v292 = vsub.s32 2, %v291
    %v293 = vrot.slane %v153, %v292
    %v294 = vadd.f32 %v288, %v293
    %v295 = vadd.f32 %v289, %v293
    %v296 = vmax.f32 %v294, 0.0
    %v297 = vmax.f32 %v295, 0.0
    %v298 = vlaneseq
    %v299 = vshrl.u32 %v298, 7
    %v300 = vsub.s32 3, %v299
    %v301 = vrot.slane %v153, %v300
    %v303 = vsel %vm240, %v296, 0
    %v306 = vsel %vm240, %v297, 0
    %308 = vmatprep.subr.mxu0 0.0
    %309 = vmatpush1.msra.mxu0 %v145
    %310 = vmatprep.subr.mxu0 0.0
    %311 = vmatpush1.msra.mxu0 %v146
    %312 = vmatprep.subr.mxu0 0.0
    %313 = vmatpush1.msra.mxu0 %v147
    %314 = vmatprep.subr.mxu0 0.0
    %315 = vmatpush1.msra.mxu0 %v148
    %316 = vmatprep.subr.mxu0 0.0
    %317 = vmatpush1.msra.mxu0 0.0
    %318 = vmatprep.subr.mxu0 0.0
    %319 = vmatpush1.msra.mxu0 0.0
    %320 = vmatprep.subr.mxu0 0.0
    %321 = vmatpush1.msra.mxu0 0.0
    %322 = vmatprep.subr.mxu0 0.0
    %323 = vmatpush1.msra.mxu0 0.0
    %324 = vmatprep.subr.mxu0 0.0
    %325 = vmatpush1.msra.mxu0 0.0
    %326 = vmatprep.subr.mxu0 0.0
    %327 = vmatpush1.msra.mxu0 0.0
    %328 = vmatprep.subr.mxu0 0.0
    %329 = vmatpush1.msra.mxu0 0.0
    %330 = vmatprep.subr.mxu0 0.0
    %331 = vmatpush1.msra.mxu0 0.0
    %332 = vmatprep.subr.mxu0 0.0
    %333 = vmatpush1.msra.mxu0 0.0
    %334 = vmatprep.subr.mxu0 0.0
    %335 = vmatpush1.msra.mxu0 0.0
    %336 = vmatprep.subr.mxu0 0.0
    %337 = vmatpush1.msra.mxu0 0.0
    %338 = vmatprep.subr.mxu0 0.0
    %339 = vmatpush1.msra.mxu0 0.0
    %340 = vmatprep.subr.mxu0 0.0
    %341 = vmatpush1.msra.mxu0 0.0
    %342 = vmatprep.subr.mxu0 0.0
    %343 = vmatpush1.msra.mxu0 0.0
    %344 = vmatprep.subr.mxu0 0.0
    %345 = vmatpush1.msra.mxu0 0.0
    %346 = vmatprep.subr.mxu0 0.0
    %347 = vmatpush1.msra.mxu0 0.0
    %348 = vmatprep.subr.mxu0 0.0
    %349 = vmatpush1.msra.mxu0 0.0
    %350 = vmatprep.subr.mxu0 0.0
    %351 = vmatpush1.msra.mxu0 0.0
    %352 = vmatprep.subr.mxu0 0.0
    %353 = vmatpush1.msra.mxu0 0.0
    %354 = vmatprep.subr.mxu0 0.0
    %355 = vmatpush1.msra.mxu0 0.0
    %356 = vmatprep.subr.mxu0 0.0
    %357 = vmatpush1.msra.mxu0 0.0
    %358 = vmatprep.subr.mxu0 0.0
    %359 = vmatpush1.msra.mxu0 0.0
    %360 = vmatprep.subr.mxu0 0.0
    %361 = vmatpush1.msra.mxu0 0.0
    %362 = vmatprep.subr.mxu0 0.0
    %363 = vmatpush1.msra.mxu0 0.0
    %364 = vmatprep.subr.mxu0 0.0
    %365 = vmatpush1.msra.mxu0 0.0
    %366 = vmatprep.subr.mxu0 0.0
    %367 = vmatpush1.msra.mxu0 0.0
    %368 = vmatprep.subr.mxu0 0.0
    %369 = vmatpush1.msra.mxu0 0.0
    %370 = vmatprep.subr.mxu0 0.0
    %371 = vmatpush1.msra.mxu0 0.0
    %372 = vmatprep.mubr.f32.mxu0 0.0
    %373 = vmatmul.mubr.f32.gmra.mrb[0].mxu0 %v303
    %v374 = vpop.f32.mrb[0].mxu0
    %v375 = vadd.f32 %v301, %v374
    %v376 = vpop.f32.mrb[0].mxu0
    %377 = vmatprep.mubr.f32.mxu0 0.0
    %378 = vmatmul.mubr.f32.gmra.mrb[0].mxu0 %v306
    %v379 = vpop.f32.mrb[0].mxu0
    %v380 = vadd.f32 %v301, %v379
    %v381 = vpop.f32.mrb[0].mxu0
    %382 = vdwg.mxu0
    %v383 = vld [vmem:[%s10] sm:$0x1]
    %v384 = vld [vmem:[%s10 + $0x1] sm:$0x1]
    %v385 = vld [vmem:[#allocation10] sm:$0xff]
    %v386 = vld [vmem:[#allocation10 + $0x8] sm:$0xff]
    %v387 = vld [vmem:[#allocation10 + $0x10] sm:$0xff]
    %v388 = vld [vmem:[#allocation10 + $0x18] sm:$0xff]
    %v389 = vlaneseq
    %v390 = vshrl.u32 %v389, 7
    %v391 = vsub.s32 0, %v390
    %v392 = vrot.slane %v383, %v391
    %v394 = vsel %vm240, %v375, 0
    %v397 = vsel %vm240, %v380, 0
    %399 = vmatprep.subr.mxu0 0.0
    %400 = vmatpush1.msra.mxu0 %v385
    %401 = vmatprep.subr.mxu0 0.0
    %402 = vmatpush1.msra.mxu0 %v386
    %403 = vmatprep.subr.mxu0 0.0
    %404 = vmatpush1.msra.mxu0 %v387
    %405 = vmatprep.subr.mxu0 0.0
    %406 = vmatpush1.msra.mxu0 %v388
    %407 = vmatprep.subr.mxu0 0.0
    %408 = vmatpush1.msra.mxu0 0.0
    %409 = vmatprep.subr.mxu0 0.0
    %410 = vmatpush1.msra.mxu0 0.0
    %411 = vmatprep.subr.mxu0 0.0
    %412 = vmatpush1.msra.mxu0 0.0
    %413 = vmatprep.subr.mxu0 0.0
    %414 = vmatpush1.msra.mxu0 0.0
    %415 = vmatprep.subr.mxu0 0.0
    %416 = vmatpush1.msra.mxu0 0.0
    %417 = vmatprep.subr.mxu0 0.0
    %418 = vmatpush1.msra.mxu0 0.0
    %419 = vmatprep.subr.mxu0 0.0
    %420 = vmatpush1.msra.mxu0 0.0
    %421 = vmatprep.subr.mxu0 0.0
    %422 = vmatpush1.msra.mxu0 0.0
    %423 = vmatprep.subr.mxu0 0.0
    %424 = vmatpush1.msra.mxu0 0.0
    %425 = vmatprep.subr.mxu0 0.0
    %426 = vmatpush1.msra.mxu0 0.0
    %427 = vmatprep.subr.mxu0 0.0
    %428 = vmatpush1.msra.mxu0 0.0
    %429 = vmatprep.subr.mxu0 0.0
    %430 = vmatpush1.msra.mxu0 0.0
    %431 = vmatprep.subr.mxu0 0.0
    %432 = vmatpush1.msra.mxu0 0.0
    %433 = vmatprep.subr.mxu0 0.0
    %434 = vmatpush1.msra.mxu0 0.0
    %435 = vmatprep.subr.mxu0 0.0
    %436 = vmatpush1.msra.mxu0 0.0
    %437 = vmatprep.subr.mxu0 0.0
    %438 = vmatpush1.msra.mxu0 0.0
    %439 = vmatprep.subr.mxu0 0.0
    %440 = vmatpush1.msra.mxu0 0.0
    %441 = vmatprep.subr.mxu0 0.0
    %442 = vmatpush1.msra.mxu0 0.0
    %443 = vmatprep.subr.mxu0 0.0
    %444 = vmatpush1.msra.mxu0 0.0
    %445 = vmatprep.subr.mxu0 0.0
    %446 = vmatpush1.msra.mxu0 0.0
    %447 = vmatprep.subr.mxu0 0.0
    %448 = vmatpush1.msra.mxu0 0.0
    %449 = vmatprep.subr.mxu0 0.0
    %450 = vmatpush1.msra.mxu0 0.0
    %451 = vmatprep.subr.mxu0 0.0
    %452 = vmatpush1.msra.mxu0 0.0
    %453 = vmatprep.subr.mxu0 0.0
    %454 = vmatpush1.msra.mxu0 0.0
    %455 = vmatprep.subr.mxu0 0.0
    %456 = vmatpush1.msra.mxu0 0.0
    %457 = vmatprep.subr.mxu0 0.0
    %458 = vmatpush1.msra.mxu0 0.0
    %459 = vmatprep.subr.mxu0 0.0
    %460 = vmatpush1.msra.mxu0 0.0
    %461 = vmatprep.subr.mxu0 0.0
    %462 = vmatpush1.msra.mxu0 0.0
    %463 = vmatprep.mubr.f32.mxu0 0.0
    %464 = vmatmul.mubr.f32.gmra.mrb[0].mxu0 %v394
    %v465 = vpop.f32.mrb[0].mxu0
    %v466 = vadd.f32 %v392, %v465
    %v467 = vpop.f32.mrb[0].mxu0
    %468 = vmatprep.mubr.f32.mxu0 0.0
    %469 = vmatmul.mubr.f32.gmra.mrb[0].mxu0 %v397
    %v470 = vpop.f32.mrb[0].mxu0
    %v471 = vadd.f32 %v392, %v470
    %v472 = vpop.f32.mrb[0].mxu0
    %473 = vdwg.mxu0
    %v474 = vld [vmem:[#allocation11] sm:$0xff]
    %v475 = vld [vmem:[#allocation11 + $0x8] sm:$0xff]
    %v476 = vld [vmem:[#allocation11 + $0x10] sm:$0xff]
    %v477 = vld [vmem:[#allocation11 + $0x18] sm:$0xff]
    %v478 = vlaneseq
    %v479 = vshrl.u32 %v478, 7
    %v480 = vsub.s32 0, %v479
    %v481 = vrot.slane %v384, %v480
    %v483 = vsel %vm240, %v466, 0
    %v486 = vsel %vm240, %v471, 0
    %488 = vmatprep.subr.mxu0 0.0
    %489 = vmatpush1.msra.mxu0 %v474
    %490 = vmatprep.subr.mxu0 0.0
    %491 = vmatpush1.msra.mxu0 %v475
    %492 = vmatprep.subr.mxu0 0.0
    %493 = vmatpush1.msra.mxu0 %v476
    %494 = vmatprep.subr.mxu0 0.0
    %495 = vmatpush1.msra.mxu0 %v477
    %496 = vmatprep.subr.mxu0 0.0
    %497 = vmatpush1.msra.mxu0 0.0
    %498 = vmatprep.subr.mxu0 0.0
    %499 = vmatpush1.msra.mxu0 0.0
    %500 = vmatprep.subr.mxu0 0.0
    %501 = vmatpush1.msra.mxu0 0.0
    %502 = vmatprep.subr.mxu0 0.0
    %503 = vmatpush1.msra.mxu0 0.0
    %504 = vmatprep.subr.mxu0 0.0
    %505 = vmatpush1.msra.mxu0 0.0
    %506 = vmatprep.subr.mxu0 0.0
    %507 = vmatpush1.msra.mxu0 0.0
    %508 = vmatprep.subr.mxu0 0.0
    %509 = vmatpush1.msra.mxu0 0.0
    %510 = vmatprep.subr.mxu0 0.0
    %511 = vmatpush1.msra.mxu0 0.0
    %512 = vmatprep.subr.mxu0 0.0
    %513 = vmatpush1.msra.mxu0 0.0
    %514 = vmatprep.subr.mxu0 0.0
    %515 = vmatpush1.msra.mxu0 0.0
    %516 = vmatprep.subr.mxu0 0.0
    %517 = vmatpush1.msra.mxu0 0.0
    %518 = vmatprep.subr.mxu0 0.0
    %519 = vmatpush1.msra.mxu0 0.0
    %520 = vmatprep.subr.mxu0 0.0
    %521 = vmatpush1.msra.mxu0 0.0
    %522 = vmatprep.subr.mxu0 0.0
    %523 = vmatpush1.msra.mxu0 0.0
    %524 = vmatprep.subr.mxu0 0.0
    %525 = vmatpush1.msra.mxu0 0.0
    %526 = vmatprep.subr.mxu0 0.0
    %527 = vmatpush1.msra.mxu0 0.0
    %528 = vmatprep.subr.mxu0 0.0
    %529 = vmatpush1.msra.mxu0 0.0
    %530 = vmatprep.subr.mxu0 0.0
    %531 = vmatpush1.msra.mxu0 0.0
    %532 = vmatprep.subr.mxu0 0.0
    %533 = vmatpush1.msra.mxu0 0.0
    %534 = vmatprep.subr.mxu0 0.0
    %535 = vmatpush1.msra.mxu0 0.0
    %536 = vmatprep.subr.mxu0 0.0
    %537 = vmatpush1.msra.mxu0 0.0
    %538 = vmatprep.subr.mxu0 0.0
    %539 = vmatpush1.msra.mxu0 0.0
    %540 = vmatprep.subr.mxu0 0.0
    %541 = vmatpush1.msra.mxu0 0.0
    %542 = vmatprep.subr.mxu0 0.0
    %543 = vmatpush1.msra.mxu0 0.0
    %544 = vmatprep.subr.mxu0 0.0
    %545 = vmatpush1.msra.mxu0 0.0
    %546 = vmatprep.subr.mxu0 0.0
    %547 = vmatpush1.msra.mxu0 0.0
    %548 = vmatprep.subr.mxu0 0.0
    %549 = vmatpush1.msra.mxu0 0.0
    %550 = vmatprep.subr.mxu0 0.0
    %551 = vmatpush1.msra.mxu0 0.0
    %552 = vmatprep.mubr.f32.mxu0 0.0
    %553 = vmatmul.mubr.f32.gmra.mrb[0].mxu0 %v483
    %v554 = vpop.f32.mrb[0].mxu0
    %v555 = vadd.f32 %v481, %v554
    %v556 = vpop.f32.mrb[0].mxu0
    %557 = vmatprep.mubr.f32.mxu0 0.0
    %558 = vmatmul.mubr.f32.gmra.mrb[0].mxu0 %v486
    %v559 = vpop.f32.mrb[0].mxu0
    %v560 = vadd.f32 %v481, %v559
    %v561 = vpop.f32.mrb[0].mxu0
    %562 = vdwg.mxu0
    %v563 = vmul.f32 %v555, %v555
    %v564 = vmul.f32 %v560, %v560
    %v565 = vsel %vm240, %v563, 0.0
    %566 = vadd.xlane.f32.xlu0 %v565
    %v567 = vpop.xlane.xlu0 %566
    %v568 = vsel %vm240, %v564, 0.0
    %569 = vadd.xlane.f32.xlu0 %v568
    %v570 = vpop.xlane.xlu0 %569
    %v571 = vrsqrt.pop %v567
    %v572 = vmul.f32 %v567, %v571
    %vm573 = vcmp.eq.f32.partialorder %v567, inf
    %v574 = vsel %vm573, %v567, %v572
    %vm575 = vcmp.eq.f32.partialorder %v567, 0.0
    %v576 = vand.u32 %v567, 2147483648
    %v577 = vsel %vm575, %v576, %v574
    %v578 = vrsqrt.pop %v570
    %v579 = vmul.f32 %v570, %v578
    %vm580 = vcmp.eq.f32.partialorder %v570, inf
    %v581 = vsel %vm580, %v570, %v579
    %vm582 = vcmp.eq.f32.partialorder %v570, 0.0
    %v583 = vand.u32 %v570, 2147483648
    %v584 = vsel %vm582, %v583, %v581
    %v585 = vmax.f32 %v577, 1e-12
    %v586 = vmax.f32 %v584, 1e-12
    %v587 = vrcp.pop %v585
    %v588 = vmul.f32 %v555, %v587
    %v589 = vrcp.pop %v586
    %v590 = vmul.f32 %v560, %v589
    %v591 = vmul.f32 %v375, %v375
    %v592 = vmul.f32 %v380, %v380
    %v593 = vsel %vm240, %v591, 0.0
    %594 = vadd.xlane.f32.xlu0 %v593
    %v595 = vpop.xlane.xlu0 %594
    %v596 = vsel %vm240, %v592, 0.0
    %597 = vadd.xlane.f32.xlu0 %v596
    %v598 = vpop.xlane.xlu0 %597
    %v599 = vrsqrt.pop %v595
    %v600 = vmul.f32 %v595, %v599
    %vm601 = vcmp.eq.f32.partialorder %v595, inf
    %v602 = vsel %vm601, %v595, %v600
    %vm603 = vcmp.eq.f32.partialorder %v595, 0.0
    %v604 = vand.u32 %v595, 2147483648
    %v605 = vsel %vm603, %v604, %v602
    %v606 = vrsqrt.pop %v598
    %v607 = vmul.f32 %v598, %v606
    %vm608 = vcmp.eq.f32.partialorder %v598, inf
    %v609 = vsel %vm608, %v598, %v607
    %vm610 = vcmp.eq.f32.partialorder %v598, 0.0
    %v611 = vand.u32 %v598, 2147483648
    %v612 = vsel %vm610, %v611, %v609
    %v613 = vmax.f32 %v605, 1e-12
    %v614 = vmax.f32 %v612, 1e-12
    %v615 = vrcp.pop %v613
    %v616 = vmul.f32 %v375, %v615
    %v617 = vrcp.pop %v614
    %v618 = vmul.f32 %v380, %v617
    %v620 = vsel %vm240, %v590, 0
    %v623 = vsel %vm240, %v618, 0
    %625 = vmatprep.subr.mxu0 0.0
    %626 = vmatpush1.xpose.msra.mxu0 %v623
    %627 = vmatprep.subr.mxu0 0.0
    %628 = vmatpush1.xpose.msra.mxu0 0.0
    %629 = vmatprep.subr.mxu0 0.0
    %630 = vmatpush1.xpose.msra.mxu0 0.0
    %631 = vmatprep.subr.mxu0 0.0
    %632 = vmatpush1.xpose.msra.mxu0 0.0
    %633 = vmatprep.subr.mxu0 0.0
    %634 = vmatpush1.xpose.msra.mxu0 0.0
    %635 = vmatprep.subr.mxu0 0.0
    %636 = vmatpush1.xpose.msra.mxu0 0.0
    %637 = vmatprep.subr.mxu0 0.0
    %638 = vmatpush1.xpose.msra.mxu0 0.0
    %639 = vmatprep.subr.mxu0 0.0
    %640 = vmatpush1.xpose.msra.mxu0 0.0
    %641 = vmatprep.subr.mxu0 0.0
    %642 = vmatpush1.xpose.msra.mxu0 0.0
    %643 = vmatprep.subr.mxu0 0.0
    %644 = vmatpush1.xpose.msra.mxu0 0.0
    %645 = vmatprep.subr.mxu0 0.0
    %646 = vmatpush1.xpose.msra.mxu0 0.0
    %647 = vmatprep.subr.mxu0 0.0
    %648 = vmatpush1.xpose.msra.mxu0 0.0
    %649 = vmatprep.subr.mxu0 0.0
    %650 = vmatpush1.xpose.msra.mxu0 0.0
    %651 = vmatprep.subr.mxu0 0.0
    %652 = vmatpush1.xpose.msra.mxu0 0.0
    %653 = vmatprep.subr.mxu0 0.0
    %654 = vmatpush1.xpose.msra.mxu0 0.0
    %655 = vmatprep.subr.mxu0 0.0
    %656 = vmatpush1.xpose.msra.mxu0 0.0
    %657 = vmatprep.subr.mxu0 0.0
    %658 = vmatpush1.xpose.msra.mxu0 0.0
    %659 = vmatprep.subr.mxu0 0.0
    %660 = vmatpush1.xpose.msra.mxu0 0.0
    %661 = vmatprep.subr.mxu0 0.0
    %662 = vmatpush1.xpose.msra.mxu0 0.0
    %663 = vmatprep.subr.mxu0 0.0
    %664 = vmatpush1.xpose.msra.mxu0 0.0
    %665 = vmatprep.subr.mxu0 0.0
    %666 = vmatpush1.xpose.msra.mxu0 0.0
    %667 = vmatprep.subr.mxu0 0.0
    %668 = vmatpush1.xpose.msra.mxu0 0.0
    %669 = vmatprep.subr.mxu0 0.0
    %670 = vmatpush1.xpose.msra.mxu0 0.0
    %671 = vmatprep.subr.mxu0 0.0
    %672 = vmatpush1.xpose.msra.mxu0 0.0
    %673 = vmatprep.subr.mxu0 0.0
    %674 = vmatpush1.xpose.msra.mxu0 0.0
    %675 = vmatprep.subr.mxu0 0.0
    %676 = vmatpush1.xpose.msra.mxu0 0.0
    %677 = vmatprep.subr.mxu0 0.0
    %678 = vmatpush1.xpose.msra.mxu0 0.0
    %679 = vmatprep.subr.mxu0 0.0
    %680 = vmatpush1.xpose.msra.mxu0 0.0
    %681 = vmatprep.subr.mxu0 0.0
    %682 = vmatpush1.xpose.msra.mxu0 0.0
    %683 = vmatprep.subr.mxu0 0.0
    %684 = vmatpush1.xpose.msra.mxu0 0.0
    %685 = vmatprep.subr.mxu0 0.0
    %686 = vmatpush1.xpose.msra.mxu0 0.0
    %687 = vmatprep.subr.mxu0 0.0
    %688 = vmatpush1.xpose.msra.mxu0 0.0
    %689 = vmatprep.mubr.f32.mxu0 0.0
    %690 = vmatmul.mubr.f32.gmra.mrb[0].mxu0 %v620
    %v691 = vpop.f32.mrb[0].mxu0
    %v692 = vadd.f32 0.0, %v691
    %v693 = vpop.f32.mrb[0].mxu0
    %694 = vdwg.mxu0
    %v695 = vmul.f32 %v692, 14.285714
    %vm696 = vcmask 64512
    %v697 = vsel %vm696, %v695, -inf
    %698 = vmax.xlane.f32.xlu0 %v697
    %v699 = vpop.xlane.xlu0 %698
    %v700 = vsub.f32 %v695, %v699
    %v701 = vmul.f32 %v700, 1.442695
    %v702 = vpow.pop %v701
    %v703 = vsel %vm696, %v702, 0.0
    %704 = vadd.xlane.f32.xlu0 %v703
    %v705 = vpop.xlane.xlu0 %704
    %v706 = vlog2.pop %v705
    %v707 = vmul.f32 %v706, 0.6931472
    %v708 = vadd.f32 %v699, %v707
    %v709 = vmul.f32 %v590, %v618
    %v710 = vsel %vm240, %v709, 0.0
    %711 = vadd.xlane.f32.xlu0 %v710
    %v712 = vpop.xlane.xlu0 %711
    %v713 = vmul.f32 %v712, 14.285714
    %v714 = vsub.f32 %v708, %v713
    %vm715 = vcmask 7168
    %v716 = vsel %vm715, %v714, 0.0
    %717 = vadd.xlane.f32.xlu0 %v716
    %v718 = vpop.xlane.xlu0 %717
    %v719 = vrot.slane %v718, 4
    %v720 = vadd.f32 %v718, %v719
    %v721 = vrot.slane %v720, 2
    %v722 = vadd.f32 %v720, %v721
    %v723 = vrot.slane %v722, 1
    %v724 = vadd.f32 %v722, %v723
    %s725 = vtos %v724
    %v726 = vstv %s725
    %v727 = vmul.f32 %v726, %v248
    %v729 = vsel %vm240, %v588, 0
    %v732 = vsel %vm240, %v616, 0
    %734 = vmatprep.subr.mxu0 0.0
    %735 = vmatpush1.xpose.msra.mxu0 %v732
    %736 = vmatprep.subr.mxu0 0.0
    %737 = vmatpush1.xpose.msra.mxu0 0.0
    %738 = vmatprep.subr.mxu0 0.0
    %739 = vmatpush1.xpose.msra.mxu0 0.0
    %740 = vmatprep.subr.mxu0 0.0
    %741 = vmatpush1.xpose.msra.mxu0 0.0
    %742 = vmatprep.subr.mxu0 0.0
    %743 = vmatpush1.xpose.msra.mxu0 0.0
    %744 = vmatprep.subr.mxu0 0.0
    %745 = vmatpush1.xpose.msra.mxu0 0.0
    %746 = vmatprep.subr.mxu0 0.0
    %747 = vmatpush1.xpose.msra.mxu0 0.0
    %748 = vmatprep.subr.mxu0 0.0
    %749 = vmatpush1.xpose.msra.mxu0 0.0
    %750 = vmatprep.subr.mxu0 0.0
    %751 = vmatpush1.xpose.msra.mxu0 0.0
    %752 = vmatprep.subr.mxu0 0.0
    %753 = vmatpush1.xpose.msra.mxu0 0.0
    %754 = vmatprep.subr.mxu0 0.0
    %755 = vmatpush1.xpose.msra.mxu0 0.0
    %756 = vmatprep.subr.mxu0 0.0
    %757 = vmatpush1.xpose.msra.mxu0 0.0
    %758 = vmatprep.subr.mxu0 0.0
    %759 = vmatpush1.xpose.msra.mxu0 0.0
    %760 = vmatprep.subr.mxu0 0.0
    %761 = vmatpush1.xpose.msra.mxu0 0.0
    %762 = vmatprep.subr.mxu0 0.0
    %763 = vmatpush1.xpose.msra.mxu0 0.0
    %764 = vmatprep.subr.mxu0 0.0
    %765 = vmatpush1.xpose.msra.mxu0 0.0
    %766 = vmatprep.subr.mxu0 0.0
    %767 = vmatpush1.xpose.msra.mxu0 0.0
    %768 = vmatprep.subr.mxu0 0.0
    %769 = vmatpush1.xpose.msra.mxu0 0.0
    %770 = vmatprep.subr.mxu0 0.0
    %771 = vmatpush1.xpose.msra.mxu0 0.0
    %772 = vmatprep.subr.mxu0 0.0
    %773 = vmatpush1.xpose.msra.mxu0 0.0
    %774 = vmatprep.subr.mxu0 0.0
    %775 = vmatpush1.xpose.msra.mxu0 0.0
    %776 = vmatprep.subr.mxu0 0.0
    %777 = vmatpush1.xpose.msra.mxu0 0.0
    %778 = vmatprep.subr.mxu0 0.0
    %779 = vmatpush1.xpose.msra.mxu0 0.0
    %780 = vmatprep.subr.mxu0 0.0
    %781 = vmatpush1.xpose.msra.mxu0 0.0
    %782 = vmatprep.subr.mxu0 0.0
    %783 = vmatpush1.xpose.msra.mxu0 0.0
    %784 = vmatprep.subr.mxu0 0.0
    %785 = vmatpush1.xpose.msra.mxu0 0.0
    %786 = vmatprep.subr.mxu0 0.0
    %787 = vmatpush1.xpose.msra.mxu0 0.0
    %788 = vmatprep.subr.mxu0 0.0
    %789 = vmatpush1.xpose.msra.mxu0 0.0
    %790 = vmatprep.subr.mxu0 0.0
    %791 = vmatpush1.xpose.msra.mxu0 0.0
    %792 = vmatprep.subr.mxu0 0.0
    %793 = vmatpush1.xpose.msra.mxu0 0.0
    %794 = vmatprep.subr.mxu0 0.0
    %795 = vmatpush1.xpose.msra.mxu0 0.0
    %796 = vmatprep.subr.mxu0 0.0
    %797 = vmatpush1.xpose.msra.mxu0 0.0
    %798 = vmatprep.mubr.f32.mxu0 0.0
    %799 = vmatmul.mubr.f32.gmra.mrb[0].mxu0 %v729
    %v800 = vpop.f32.mrb[0].mxu0
    %v801 = vadd.f32 0.0, %v800
    %v802 = vpop.f32.mrb[0].mxu0
    %803 = vdwg.mxu0
    %v804 = vmul.f32 %v801, 14.285714
    %v805 = vsel %vm696, %v804, -inf
    %806 = vmax.xlane.f32.xlu0 %v805
    %v807 = vpop.xlane.xlu0 %806
    %v808 = vsub.f32 %v804, %v807
    %v809 = vmul.f32 %v808, 1.442695
    %v810 = vpow.pop %v809
    %v811 = vsel %vm696, %v810, 0.0
    %812 = vadd.xlane.f32.xlu0 %v811
    %v813 = vpop.xlane.xlu0 %812
    %v814 = vlog2.pop %v813
    %v815 = vmul.f32 %v814, 0.6931472
    %v816 = vadd.f32 %v807, %v815
    %v817 = vmul.f32 %v588, %v616
    %v818 = vsel %vm240, %v817, 0.0
    %819 = vadd.xlane.f32.xlu0 %v818
    %v820 = vpop.xlane.xlu0 %819
    %v821 = vmul.f32 %v820, 14.285714
    %v822 = vsub.f32 %v816, %v821
    %v823 = vsel %vm715, %v822, 0.0
    %824 = vadd.xlane.f32.xlu0 %v823
    %v825 = vpop.xlane.xlu0 %824
    %v826 = vrot.slane %v825, 4
    %v827 = vadd.f32 %v825, %v826
    %v828 = vrot.slane %v827, 2
    %v829 = vadd.f32 %v827, %v828
    %v830 = vrot.slane %v829, 1
    %v831 = vadd.f32 %v829, %v830
    %s832 = vtos %v831
    %v833 = vstv %s832
    %v834 = vmul.f32 %v833, %v248
    %v835 = vadd.f32 %v727, %v834
    %vm836 = vcmask 0
    %837 = vst.msk [vmem:[#allocation13] sm:$0x1] %vm836, %v835
    // Predicated region
    $region70: #{contrastive_head_forward.1} parent=1 // pred_check
      _
    $region71: #{contrastive_head_forward.1} parent=1 // pred_check_branch
      %839 = sbr.rel (0) target = $region73
    $region72: #{contrastive_head_forward.1} parent=1 // pred_region
      %s841 = ssub.s32 16, 16
      %842 = vsyncadd [#allocation4], %s841
      %s844 = sshll.u32 [#allocation13], 4
      %s845 = int_to_ptr.vmem [resolvable:$true] %s844
      %847 = dma.vmem_to_hbm [thread:$0]  %s845, 16, %s11, [#allocation4]
    $region73: #{contrastive_head_forward.1} parent=1 // pred_fallthru
      _
    // Predicated region
    $region74: #{contrastive_head_forward.1} parent=1 // pred_check
      _
    $region75: #{contrastive_head_forward.1} parent=1 // pred_check_branch
      %849 = sbr.rel (0) target = $region77
    $region76: #{contrastive_head_forward.1} parent=1 // pred_region
      %850 = dma.done [#allocation4], 16
    $region77: #{contrastive_head_forward.1} parent=1 // pred_fallthru
      _
    %851 = vsyncpa [#allocation3], 1
    %852 = vsyncpa [#allocation6], 1
    %853 = vsyncpa [#allocation9], 1
    %854 = vsyncpa [#allocation12], 1
    %855 = vsyncpa [#allocation4], 1

</llo_original>
